<compile_context>
chip_gen: v5e
topology: v5e:2x2
jax: 0.10.0
libtpu: 0.0.40
codegen_flags: <defaults>
</compile_context>

<pallas_src>
import functools

import jax
import jax.numpy as jnp
from jax.experimental import pallas as pl
from jax.experimental.pallas import tpu as pltpu


_LANES = 128
# Padded-f32 input-byte budget for the single-block (un-pipelined) fused call.
_FUSED_BUDGET_BYTES = 2 * 1024 * 1024
# Per-input block-byte target for the gridded KL reduction (~2 MiB blocks:
# 2 inputs x 2 pipeline buffers ~= 8 MiB resident, safe on every chip).
_KL_BLOCK_TARGET_BYTES = 2 * 1024 * 1024
_CE_BLOCK_TARGET_BYTES = 2 * 1024 * 1024
_TILED_VMEM_LIMIT_BYTES = 32 * 1024 * 1024


# ----------------------------------------------------------------------------
# Small helpers
# ----------------------------------------------------------------------------
def _round_up(x, m):
    return -(-x // m) * m


def _padded_f32_bytes(rows, cols):
    """f32 VMEM bytes of a (rows, cols) block after (8, 128) tile padding."""
    return _round_up(rows, 8) * _round_up(cols, _LANES) * 4


def _as_lane2d(x):
    """Present a marginal as a lane-dense (rows, 128) 2-D array, rows >= 16.

    When x.size is a multiple of 128 (and >= 2048) this is a pure row-major
    reshape (bitcast, no HBM copy).  Otherwise the flat array is zero-padded,
    which is exact for the KL term (q == 0 positions contribute 0).
    """
    t = int(x.size)
    t_pad = max(_round_up(t, _LANES), 16 * _LANES)
    flat = x.reshape(t)
    if t_pad != t:
        flat = jnp.pad(flat, (0, t_pad - t))
    return flat.reshape(t_pad // _LANES, _LANES)


def _masked_kl_term(p, q, qpos):
    """q * (log q - log p) where qpos, else 0 (PyTorch kl_div semantics).

    Double-where form: the masked branch never evaluates log(0), so neither
    forward values nor gradients produce NaN there.  (If p <= 0 where q > 0,
    inf/nan is produced exactly as PyTorch does.)
    """
    q_sel = jnp.where(qpos, q, 0.0)
    q_safe = jnp.where(qpos, q, 1.0)
    p_safe = jnp.where(qpos, p, 1.0)
    return q_sel * (jnp.log(q_safe) - jnp.log(p_safe))


def _fold_rows_to_8(x):
    """Fold (r, 128) rows into an (8, 128) vreg-shaped partial sum.

    r must be 8 * 2**m; every slice offset stays a multiple of 8 rows, so the
    adds are plain sublane-tile-aligned VPU ops (no XLU collapse per step).
    """
    r = x.shape[0]
    while r > 8:
        r //= 2
        x = x[:r, :] + x[r:, :]
    return x


def _ce_rowsum(logits, tgt):
    """Per-row (logsumexp - target_logit), classes on the lane axis -> (rows, 1)."""
    m = jnp.max(logits, axis=-1, keepdims=True)
    lse = jnp.log(jnp.sum(jnp.exp(logits - m), axis=-1, keepdims=True)) + m
    col = jax.lax.broadcasted_iota(jnp.int32, logits.shape, 1)
    tgt_logit = jnp.sum(jnp.where(col == tgt, logits, 0.0), axis=-1,
                        keepdims=True)
    return lse - tgt_logit


# ----------------------------------------------------------------------------
# Fused single-block kernel: CE + every KL + kl_weight-scaled total, one call.
# Inputs : kl_weight (1,) f32 SMEM, logits (N,C), targets (N,1) i32,
#          then p_i/q_i as (rows_i, 128) in their original dtype.
# Output : (1, 128) f32 row = [ce, kl_0, ..., kl_{P-1}, total, 0, ...]
# ----------------------------------------------------------------------------
def _fused_loss_kernel(*refs, n_pairs, batches):
    kw_ref = refs[0]
    logits_ref = refs[1]
    targets_ref = refs[2]
    marg_refs = refs[3:3 + 2 * n_pairs]
    out_ref = refs[3 + 2 * n_pairs]

    logits = logits_ref[...].astype(jnp.float32)
    per_row = _ce_rowsum(logits, targets_ref[...])
    ce = jnp.sum(per_row, axis=(0, 1), keepdims=True) * (1.0 / logits.shape[0])

    kls = []
    for i in range(n_pairs):
        p = marg_refs[2 * i][...].astype(jnp.float32)
        q = marg_refs[2 * i + 1][...].astype(jnp.float32)
        term = _masked_kl_term(p, q, q > 0)
        kls.append(jnp.sum(term, axis=(0, 1), keepdims=True)
                   * (1.0 / batches[i]))

    kw = kw_ref[0]
    total = ce
    for kl in kls:
        total = total + kw * kl

    lane = jax.lax.broadcasted_iota(jnp.int32, out_ref.shape, 1)
    packed = jnp.where(lane == 0, ce, 0.0)
    for i, kl in enumerate(kls):
        packed = packed + jnp.where(lane == (i + 1), kl, 0.0)
    packed = packed + jnp.where(lane == (n_pairs + 1), total, 0.0)
    out_ref[...] = packed


def _fused_loss_call(kw, logits, targets2d, flat_margs, batches):
    n_pairs = len(flat_margs) // 2
    assert n_pairs + 2 <= _LANES, "too many marginal pairs for one output row"
    kernel = functools.partial(_fused_loss_kernel, n_pairs=n_pairs,
                               batches=tuple(batches))
    vmem = pl.BlockSpec(memory_space=pltpu.MemorySpace.VMEM)
    smem = pl.BlockSpec(memory_space=pltpu.MemorySpace.SMEM)
    return pl.pallas_call(
        kernel,
        out_shape=jax.ShapeDtypeStruct((1, _LANES), jnp.float32),
        in_specs=[smem, vmem, vmem] + [vmem] * len(flat_margs),
        out_specs=vmem,
    )(kw, logits, targets2d, *flat_margs)


# ----------------------------------------------------------------------------
# Gridded KL reduction: grid = (parallel split, arbitrary row-tile reduction),
# (8,128) accumulator, final collapse + lane-dense store on the last step.
# ----------------------------------------------------------------------------
def _kl_tiled_kernel(p_ref, q_ref, out_ref, acc_ref, *, rows, tile_r,
                     needs_mask):
    s = pl.program_id(0)
    k = pl.program_id(1)

    @pl.when(k == 0)
    def _():
        acc_ref[...] = jnp.zeros(acc_ref.shape, acc_ref.dtype)

    p = p_ref[...].astype(jnp.float32)
    q = q_ref[...].astype(jnp.float32)

    qpos = q > 0
    if needs_mask:  # only emitted when the last row tile is partial
        row = (jax.lax.broadcasted_iota(jnp.int32, q.shape, 0)
               + (s * pl.num_programs(1) + k) * tile_r)
        qpos = jnp.logical_and(qpos, row < rows)

    acc_ref[...] += _fold_rows_to_8(_masked_kl_term(p, q, qpos))

    @pl.when(k == pl.num_programs(1) - 1)
    def _():
        out_ref[...] = (jnp.zeros(out_ref.shape, out_ref.dtype)
                        + jnp.sum(acc_ref[...]))


def _kl_sum_tiled(p2, q2, *, tile_r=None, n_split=None):
    """Sum of the elementwise KL term over a (rows, 128) pair (no 1/B)."""
    rows, lanes = p2.shape
    assert lanes == _LANES and rows >= 8
    if tile_r is None:
        max_rows = max(8, _KL_BLOCK_TARGET_BYTES // (_LANES * 4))
        tile_r = 8
        while tile_r * 2 <= min(rows, max_rows):
            tile_r *= 2
    assert 8 <= tile_r <= rows
    assert (tile_r // 8) & ((tile_r // 8) - 1) == 0, "tile_r must be 8 * 2**m"

    total_tiles = -(-rows // tile_r)
    if n_split is None:
        n_split = 2 if total_tiles % 2 == 0 else 1
    if total_tiles % n_split != 0:
        n_split = 1
    inner = total_tiles // n_split
    needs_mask = (rows % tile_r) != 0

    kernel = functools.partial(_kl_tiled_kernel, rows=rows, tile_r=tile_r,
                               needs_mask=needs_mask)
    out = pl.pallas_call(
        kernel,
        grid=(n_split, inner),
        out_shape=jax.ShapeDtypeStruct((n_split, _LANES), jnp.float32),
        in_specs=[
            pl.BlockSpec((tile_r, _LANES), lambda s, k: (s * inner + k, 0)),
            pl.BlockSpec((tile_r, _LANES), lambda s, k: (s * inner + k, 0)),
        ],
        out_specs=pl.BlockSpec((1, _LANES), lambda s, k: (s, 0)),
        scratch_shapes=[pltpu.VMEM((8, _LANES), jnp.float32)],
        compiler_params=pltpu.CompilerParams(
            dimension_semantics=("parallel", "arbitrary"),
            vmem_limit_bytes=_TILED_VMEM_LIMIT_BYTES),
    )(p2, q2)
    return jnp.sum(out[:, 0])


# ----------------------------------------------------------------------------
# Gridded cross-entropy: row-tiled reduction with an accumulator.
# ----------------------------------------------------------------------------
def _ce_tiled_kernel(logits_ref, tgt_ref, out_ref, acc_ref, *, n_rows, tile_n,
                     needs_mask):
    i = pl.program_id(0)

    @pl.when(i == 0)
    def _():
        acc_ref[...] = jnp.zeros(acc_ref.shape, acc_ref.dtype)

    per_row = _ce_rowsum(logits_ref[...].astype(jnp.float32), tgt_ref[...])
    if needs_mask:
        row = jax.lax.broadcasted_iota(jnp.int32, per_row.shape, 0) + i * tile_n
        per_row = jnp.where(row < n_rows, per_row, 0.0)
    acc_ref[...] += jnp.sum(per_row, axis=(0, 1), keepdims=True)

    @pl.when(i == pl.num_programs(0) - 1)
    def _():
        out_ref[...] = (jnp.zeros(out_ref.shape, out_ref.dtype)
                        + acc_ref[...] * (1.0 / n_rows))


def _ce_tiled(logits, targets2d, *, tile_n=None):
    n, c = logits.shape
    if n < 8:
        # TODO(synk): no vocab-axis tiling; a huge-C, tiny-N head still goes
        # through the single-block CE kernel.
        kw0 = jnp.zeros((1,), jnp.float32)
        return _fused_loss_call(kw0, logits, targets2d, [], ())[0, 0]
    if tile_n is None:
        c_pad = _round_up(c, _LANES)
        budget_rows = max(8, (_CE_BLOCK_TARGET_BYTES // (c_pad * 4)) // 8 * 8)
        tile_n = min((n // 8) * 8, budget_rows)
    assert tile_n % 8 == 0 and 8 <= tile_n <= n
    grid_n = -(-n // tile_n)
    needs_mask = (n % tile_n) != 0

    kernel = functools.partial(_ce_tiled_kernel, n_rows=n, tile_n=tile_n,
                               needs_mask=needs_mask)
    out = pl.pallas_call(
        kernel,
        grid=(grid_n,),
        out_shape=jax.ShapeDtypeStruct((1, _LANES), jnp.float32),
        in_specs=[
            pl.BlockSpec((tile_n, c), lambda i: (i, 0)),
            pl.BlockSpec((tile_n, 1), lambda i: (i, 0)),
        ],
        out_specs=pl.BlockSpec((1, _LANES), lambda i: (0, 0)),
        scratch_shapes=[pltpu.VMEM((1, 1), jnp.float32)],
        compiler_params=pltpu.CompilerParams(
            dimension_semantics=("arbitrary",),
            vmem_limit_bytes=_TILED_VMEM_LIMIT_BYTES),
    )(logits, targets2d)
    return out[0, 0]


# ----------------------------------------------------------------------------
# jitted forward
# ----------------------------------------------------------------------------
@functools.partial(jax.jit, static_argnames=("attn_kl", "detach_targets"))
def _forward(output, targets, marginals, kl_weight, *, attn_kl, detach_targets):
    n = output.shape[0]
    targets2d = targets.astype(jnp.int32).reshape(n, 1)
    kw = jnp.asarray(kl_weight, dtype=jnp.float32).reshape(1)

    logits_bytes = _padded_f32_bytes(*output.shape) + _padded_f32_bytes(n, 1)

    if not attn_kl:
        if logits_bytes <= _FUSED_BUDGET_BYTES:
            return (_fused_loss_call(kw, output, targets2d, [], ())[0, 0],)
        return (_ce_tiled(output, targets2d),)

    pairs = []
    for marg1, marg2 in marginals:
        if detach_targets:
            marg2 = jax.lax.stop_gradient(marg2)
        pairs.append((_as_lane2d(marg1), _as_lane2d(marg2), marg1.shape[0]))

    marg_bytes = sum(2 * _padded_f32_bytes(*p.shape) for p, _, _ in pairs)

    # Everything small -> one fused kernel finishing the whole loss.
    if logits_bytes + marg_bytes <= _FUSED_BUDGET_BYTES:
        flat = [x for p, q, _ in pairs for x in (p, q)]
        out = _fused_loss_call(kw, output, targets2d, flat,
                               tuple(b for _, _, b in pairs))
        n_pairs = len(pairs)
        ce = out[0, 0]
        kls = [out[0, 1 + i] for i in range(n_pairs)]
        total = out[0, 1 + n_pairs]
        return ce, kls, total

    # Large-input path: gridded CE + per-pair gridded KL reductions.
    if logits_bytes <= _FUSED_BUDGET_BYTES:
        ce = _fused_loss_call(kw, output, targets2d, [], ())[0, 0]
    else:
        ce = _ce_tiled(output, targets2d)
    kls = [_kl_sum_tiled(p, q) * (1.0 / b) for p, q, b in pairs]
    total = ce
    if kls:
        total = ce + kw[0] * sum(kls)
    return ce, kls, total


class MarginalsExtendedLoss:
    """JAX/Pallas forward-pass equivalent of the PyTorch MarginalsExtendedLoss."""

    def __init__(self, attn_kl=True, kl_weight=1.0, detach_targets=True):
        self.attn_kl = bool(attn_kl)
        self.kl_weight = float(kl_weight)
        self.detach_targets = bool(detach_targets)

    def __call__(self, output, targets, marginals):
        marginals = tuple((m1, m2) for m1, m2 in marginals)
        return _forward(output, targets, marginals, self.kl_weight,
                        attn_kl=self.attn_kl,
                        detach_targets=self.detach_targets)


# ----------------------------------------------------------------------------
# Pure-JAX reference for validation
# ----------------------------------------------------------------------------
def _ref_forward(output, targets, marginals, kl_weight=1.0):
    logits = output.astype(jnp.float32)
    lse = jax.scipy.special.logsumexp(logits, axis=-1)
    ce = jnp.mean(lse - logits[jnp.arange(logits.shape[0]), targets])
    kls = []
    for p, q in marginals:
        p = p.astype(jnp.float32)
        q = q.astype(jnp.float32)
        term = jnp.where(q > 0, q * (jnp.log(q) - jnp.log(p)), 0.0)
        kls.append(jnp.sum(term) / p.shape[0])
    total = ce + kl_weight * sum(kls)
    return ce, kls, total


if __name__ == "__main__":
    key = jax.random.PRNGKey(0)
    ks = jax.random.split(key, 12)

    def mk_marg(k, shape):
        return jax.nn.softmax(jax.random.normal(k, shape, jnp.float32), axis=-1)

    # --- 1) small everything -> single fused kernel -------------------------
    N, C = 8, 32
    output = jax.random.normal(ks[0], (N, C), dtype=jnp.float32)
    targets = jax.random.randint(ks[1], (N,), 0, C, dtype=jnp.int32)
    B, H, L = 2, 2, 8
    marginals = [
        (mk_marg(ks[2], (B, H, L, L)), mk_marg(ks[3], (B, H, L, L))),
        (mk_marg(ks[4], (B, H, L, L)), mk_marg(ks[5], (B, H, L, L))),
    ]
    loss_mod = MarginalsExtendedLoss(attn_kl=True, kl_weight=0.7,
                                     detach_targets=True)
    ce, kls, total = loss_mod(output, targets, marginals)
    jax.block_until_ready(total)
    ce_r, kls_r, total_r = _ref_forward(output, targets, marginals, 0.7)
    assert jnp.allclose(ce, ce_r, atol=1e-5, rtol=1e-5), (ce, ce_r)
    for a, b in zip(kls, kls_r):
        assert jnp.allclose(a, b, atol=1e-5, rtol=1e-5), (a, b)
    assert jnp.allclose(total, total_r, atol=1e-5, rtol=1e-5), (total, total_r)

    # CE-only mode
    (ce_only,) = MarginalsExtendedLoss(attn_kl=False)(output, targets, marginals)
    assert jnp.allclose(ce_only, ce_r, atol=1e-5, rtol=1e-5), (ce_only, ce_r)

    # --- 2) gridded KL: multi-tile, partial-tile mask, 2-way split, bf16 ----
    a = mk_marg(ks[6], (2, 3, 32, 32))
    b = mk_marg(ks[7], (2, 3, 32, 32))
    for dt in (jnp.float32, jnp.bfloat16):
        ad = a.astype(dt).astype(jnp.float32)
        bd = b.astype(dt).astype(jnp.float32)
        ref = jnp.sum(jnp.where(bd > 0, bd * (jnp.log(bd) - jnp.log(ad)),
                                0.0)) / 2
        p2 = _as_lane2d(a.astype(dt))
        q2 = _as_lane2d(b.astype(dt))
        got1 = _kl_sum_tiled(p2, q2, tile_r=16, n_split=1) / 2  # 3 serial tiles
        got2 = _kl_sum_tiled(p2, q2, tile_r=32, n_split=2) / 2  # split + masked tail
        jax.block_until_ready((got1, got2))
        assert jnp.allclose(got1, ref, atol=1e-5, rtol=1e-4), (dt, got1, ref)
        assert jnp.allclose(got2, ref, atol=1e-5, rtol=1e-4), (dt, got2, ref)

    # --- 3) gridded CE: forced row tiling with a masked tail ----------------
    N2, C2 = 56, 300
    logits2 = jax.random.normal(ks[8], (N2, C2), dtype=jnp.float32)
    targets2 = jax.random.randint(ks[9], (N2,), 0, C2, dtype=jnp.int32)
    ce_t = _ce_tiled(logits2, targets2.reshape(N2, 1), tile_n=16)
    jax.block_until_ready(ce_t)
    lse2 = jax.scipy.special.logsumexp(logits2, axis=-1)
    ce_t_ref = jnp.mean(lse2 - logits2[jnp.arange(N2), targets2])
    assert jnp.allclose(ce_t, ce_t_ref, atol=1e-5, rtol=1e-5), (ce_t, ce_t_ref)

    # --- 4) big marginals through the module -> gridded dispatch path -------
    big1 = mk_marg(ks[10], (4, 16, 128, 128))
    big2 = mk_marg(ks[11], (4, 16, 128, 128))
    marg_mix = [(marginals[0][0], marginals[0][1]), (big1, big2)]
    ce2, kls2, total2 = loss_mod(output, targets, marg_mix)
    jax.block_until_ready(total2)
    ce2_r, kls2_r, total2_r = _ref_forward(output, targets, marg_mix, 0.7)
    assert jnp.allclose(ce2, ce2_r, atol=1e-5, rtol=1e-5), (ce2, ce2_r)
    for a2, b2 in zip(kls2, kls2_r):
        assert jnp.allclose(a2, b2, atol=1e-4, rtol=1e-4), (a2, b2)
    assert jnp.allclose(total2, total2_r, atol=1e-3, rtol=1e-4), (total2, total2_r)

    print("KERNEL_OK")
</pallas_src>

<mosaic_0001>
module attributes {stable_mosaic.version = 11 : i64} {
  func.func @_fused_loss_kernel(%arg0: memref<1xf32, #tpu.memory_space<smem>>, %arg1: memref<8x32xf32, #tpu.memory_space<vmem>>, %arg2: memref<8x1xi32, #tpu.memory_space<vmem>>, %arg3: memref<16x128xf32, #tpu.memory_space<vmem>>, %arg4: memref<16x128xf32, #tpu.memory_space<vmem>>, %arg5: memref<16x128xf32, #tpu.memory_space<vmem>>, %arg6: memref<16x128xf32, #tpu.memory_space<vmem>>, %arg7: memref<1x128xf32, #tpu.memory_space<vmem>>) attributes {dimension_semantics = [], scalar_prefetch = 0 : i64, scratch_operands = 0 : i64, tpu.core_type = #tpu.core_type<tc>} {
    %c0 = arith.constant 0 : index
    %c0_0 = arith.constant 0 : index
    %0 = vector.load %arg1[%c0, %c0_0] : memref<8x32xf32, #tpu.memory_space<vmem>>, vector<8x32xf32>
    %c0_1 = arith.constant 0 : index
    %c0_2 = arith.constant 0 : index
    %1 = vector.load %arg2[%c0_1, %c0_2] : memref<8x1xi32, #tpu.memory_space<vmem>>, vector<8x1xi32>
    %cst = arith.constant dense<0xFF800000> : vector<8xf32>
    %2 = vector.multi_reduction <maximumf>, %0, %cst [1] : vector<8x32xf32> to vector<8xf32>
    %3 = vector.shape_cast %2 : vector<8xf32> to vector<8x1xf32>
    %4 = vector.broadcast %3 : vector<8x1xf32> to vector<8x32xf32>
    %5 = arith.subf %0, %4 : vector<8x32xf32>
    %6 = math.exp %5 : vector<8x32xf32>
    %cst_3 = arith.constant dense<0.000000e+00> : vector<8xf32>
    %7 = vector.multi_reduction <add>, %6, %cst_3 [1] : vector<8x32xf32> to vector<8xf32>
    %8 = vector.shape_cast %7 : vector<8xf32> to vector<8x1xf32>
    %9 = math.log %8 : vector<8x1xf32>
    %10 = arith.addf %9, %3 : vector<8x1xf32>
    %11 = tpu.iota {dimensions = array<i32: 1>} : vector<8x32xi32>
    %12 = vector.broadcast %1 : vector<8x1xi32> to vector<8x32xi32>
    %13 = arith.cmpi eq, %11, %12 : vector<8x32xi32>
    %cst_4 = arith.constant 0.000000e+00 : f32
    %14 = vector.broadcast %cst_4 : f32 to vector<8x32xf32>
    %15 = arith.select %13, %0, %14 : vector<8x32xi1>, vector<8x32xf32>
    %cst_5 = arith.constant dense<0.000000e+00> : vector<8xf32>
    %16 = vector.multi_reduction <add>, %15, %cst_5 [1] : vector<8x32xf32> to vector<8xf32>
    %17 = vector.shape_cast %16 : vector<8xf32> to vector<8x1xf32>
    %18 = arith.subf %10, %17 : vector<8x1xf32>
    %19 = vector.shape_cast %18 : vector<8x1xf32> to vector<1x8x1xf32>
    %cst_6 = arith.constant dense<0.000000e+00> : vector<1xf32>
    %20 = vector.multi_reduction <add>, %19, %cst_6 [1, 2] : vector<1x8x1xf32> to vector<1xf32>
    %21 = vector.shape_cast %20 : vector<1xf32> to vector<1x1x1xf32>
    %22 = vector.extract %21[0, 0, 0] : f32 from vector<1x1x1xf32>
    %23 = vector.broadcast %22 : f32 to vector<1x1xf32>
    %cst_7 = arith.constant 1.250000e-01 : f32
    %24 = vector.broadcast %cst_7 : f32 to vector<1x1xf32>
    %25 = arith.mulf %23, %24 : vector<1x1xf32>
    %c0_8 = arith.constant 0 : index
    %c0_9 = arith.constant 0 : index
    %26 = vector.load %arg3[%c0_8, %c0_9] : memref<16x128xf32, #tpu.memory_space<vmem>>, vector<16x128xf32>
    %c0_10 = arith.constant 0 : index
    %c0_11 = arith.constant 0 : index
    %27 = vector.load %arg4[%c0_10, %c0_11] : memref<16x128xf32, #tpu.memory_space<vmem>>, vector<16x128xf32>
    %cst_12 = arith.constant 0.000000e+00 : f32
    %28 = vector.broadcast %cst_12 : f32 to vector<16x128xf32>
    %29 = arith.cmpf ogt, %27, %28 : vector<16x128xf32>
    %cst_13 = arith.constant 0.000000e+00 : f32
    %30 = vector.broadcast %cst_13 : f32 to vector<16x128xf32>
    %31 = arith.select %29, %27, %30 : vector<16x128xi1>, vector<16x128xf32>
    %cst_14 = arith.constant 1.000000e+00 : f32
    %32 = vector.broadcast %cst_14 : f32 to vector<16x128xf32>
    %33 = arith.select %29, %27, %32 : vector<16x128xi1>, vector<16x128xf32>
    %cst_15 = arith.constant 1.000000e+00 : f32
    %34 = vector.broadcast %cst_15 : f32 to vector<16x128xf32>
    %35 = arith.select %29, %26, %34 : vector<16x128xi1>, vector<16x128xf32>
    %36 = math.log %33 : vector<16x128xf32>
    %37 = math.log %35 : vector<16x128xf32>
    %38 = arith.subf %36, %37 : vector<16x128xf32>
    %39 = arith.mulf %31, %38 : vector<16x128xf32>
    %40 = vector.shape_cast %39 : vector<16x128xf32> to vector<1x16x128xf32>
    %cst_16 = arith.constant dense<0.000000e+00> : vector<1xf32>
    %41 = vector.multi_reduction <add>, %40, %cst_16 [1, 2] : vector<1x16x128xf32> to vector<1xf32>
    %42 = vector.shape_cast %41 : vector<1xf32> to vector<1x1x1xf32>
    %43 = vector.extract %42[0, 0, 0] : f32 from vector<1x1x1xf32>
    %44 = vector.broadcast %43 : f32 to vector<1x1xf32>
    %cst_17 = arith.constant 5.000000e-01 : f32
    %45 = vector.broadcast %cst_17 : f32 to vector<1x1xf32>
    %46 = arith.mulf %44, %45 : vector<1x1xf32>
    %c0_18 = arith.constant 0 : index
    %c0_19 = arith.constant 0 : index
    %47 = vector.load %arg5[%c0_18, %c0_19] : memref<16x128xf32, #tpu.memory_space<vmem>>, vector<16x128xf32>
    %c0_20 = arith.constant 0 : index
    %c0_21 = arith.constant 0 : index
    %48 = vector.load %arg6[%c0_20, %c0_21] : memref<16x128xf32, #tpu.memory_space<vmem>>, vector<16x128xf32>
    %cst_22 = arith.constant 0.000000e+00 : f32
    %49 = vector.broadcast %cst_22 : f32 to vector<16x128xf32>
    %50 = arith.cmpf ogt, %48, %49 : vector<16x128xf32>
    %cst_23 = arith.constant 0.000000e+00 : f32
    %51 = vector.broadcast %cst_23 : f32 to vector<16x128xf32>
    %52 = arith.select %50, %48, %51 : vector<16x128xi1>, vector<16x128xf32>
    %cst_24 = arith.constant 1.000000e+00 : f32
    %53 = vector.broadcast %cst_24 : f32 to vector<16x128xf32>
    %54 = arith.select %50, %48, %53 : vector<16x128xi1>, vector<16x128xf32>
    %cst_25 = arith.constant 1.000000e+00 : f32
    %55 = vector.broadcast %cst_25 : f32 to vector<16x128xf32>
    %56 = arith.select %50, %47, %55 : vector<16x128xi1>, vector<16x128xf32>
    %57 = math.log %54 : vector<16x128xf32>
    %58 = math.log %56 : vector<16x128xf32>
    %59 = arith.subf %57, %58 : vector<16x128xf32>
    %60 = arith.mulf %52, %59 : vector<16x128xf32>
    %61 = vector.shape_cast %60 : vector<16x128xf32> to vector<1x16x128xf32>
    %cst_26 = arith.constant dense<0.000000e+00> : vector<1xf32>
    %62 = vector.multi_reduction <add>, %61, %cst_26 [1, 2] : vector<1x16x128xf32> to vector<1xf32>
    %63 = vector.shape_cast %62 : vector<1xf32> to vector<1x1x1xf32>
    %64 = vector.extract %63[0, 0, 0] : f32 from vector<1x1x1xf32>
    %65 = vector.broadcast %64 : f32 to vector<1x1xf32>
    %cst_27 = arith.constant 5.000000e-01 : f32
    %66 = vector.broadcast %cst_27 : f32 to vector<1x1xf32>
    %67 = arith.mulf %65, %66 : vector<1x1xf32>
    %c0_28 = arith.constant 0 : index
    %68 = memref.load %arg0[%c0_28] : memref<1xf32, #tpu.memory_space<smem>>
    %69 = vector.broadcast %68 : f32 to vector<1x1xf32>
    %70 = arith.mulf %69, %46 : vector<1x1xf32>
    %71 = arith.addf %25, %70 : vector<1x1xf32>
    %72 = vector.broadcast %68 : f32 to vector<1x1xf32>
    %73 = arith.mulf %72, %67 : vector<1x1xf32>
    %74 = arith.addf %71, %73 : vector<1x1xf32>
    %75 = tpu.iota {dimensions = array<i32: 1>} : vector<1x128xi32>
    %c0_i32 = arith.constant 0 : i32
    %76 = vector.broadcast %c0_i32 : i32 to vector<1x128xi32>
    %77 = arith.cmpi eq, %75, %76 : vector<1x128xi32>
    %cst_29 = arith.constant 0.000000e+00 : f32
    %78 = vector.shape_cast %25 : vector<1x1xf32> to vector<1x1xf32>
    %79 = vector.broadcast %78 : vector<1x1xf32> to vector<1x128xf32>
    %80 = vector.broadcast %cst_29 : f32 to vector<1x128xf32>
    %81 = arith.select %77, %79, %80 : vector<1x128xi1>, vector<1x128xf32>
    %c1_i32 = arith.constant 1 : i32
    %82 = vector.broadcast %c1_i32 : i32 to vector<1x128xi32>
    %83 = arith.cmpi eq, %75, %82 : vector<1x128xi32>
    %cst_30 = arith.constant 0.000000e+00 : f32
    %84 = vector.shape_cast %46 : vector<1x1xf32> to vector<1x1xf32>
    %85 = vector.broadcast %84 : vector<1x1xf32> to vector<1x128xf32>
    %86 = vector.broadcast %cst_30 : f32 to vector<1x128xf32>
    %87 = arith.select %83, %85, %86 : vector<1x128xi1>, vector<1x128xf32>
    %88 = arith.addf %81, %87 : vector<1x128xf32>
    %c2_i32 = arith.constant 2 : i32
    %89 = vector.broadcast %c2_i32 : i32 to vector<1x128xi32>
    %90 = arith.cmpi eq, %75, %89 : vector<1x128xi32>
    %cst_31 = arith.constant 0.000000e+00 : f32
    %91 = vector.shape_cast %67 : vector<1x1xf32> to vector<1x1xf32>
    %92 = vector.broadcast %91 : vector<1x1xf32> to vector<1x128xf32>
    %93 = vector.broadcast %cst_31 : f32 to vector<1x128xf32>
    %94 = arith.select %90, %92, %93 : vector<1x128xi1>, vector<1x128xf32>
    %95 = arith.addf %88, %94 : vector<1x128xf32>
    %c3_i32 = arith.constant 3 : i32
    %96 = vector.broadcast %c3_i32 : i32 to vector<1x128xi32>
    %97 = arith.cmpi eq, %75, %96 : vector<1x128xi32>
    %cst_32 = arith.constant 0.000000e+00 : f32
    %98 = vector.shape_cast %74 : vector<1x1xf32> to vector<1x1xf32>
    %99 = vector.broadcast %98 : vector<1x1xf32> to vector<1x128xf32>
    %100 = vector.broadcast %cst_32 : f32 to vector<1x128xf32>
    %101 = arith.select %97, %99, %100 : vector<1x128xi1>, vector<1x128xf32>
    %102 = arith.addf %95, %101 : vector<1x128xf32>
    %c0_33 = arith.constant 0 : index
    %c0_34 = arith.constant 0 : index
    %103 = vector.load %arg7[%c0_33, %c0_34] : memref<1x128xf32, #tpu.memory_space<vmem>>, vector<1x128xf32>
    tpu.vector_store %arg7[%c0_33, %c0_34], %102 {strides = array<i32>} : memref<1x128xf32, #tpu.memory_space<vmem>>, vector<1x128xf32>,
    return
  }
}

</mosaic_0001>

<llo_original>
// kernel: _forward.1
$region0: #{_forward.1}
  #allocation0 [shape = 'u32[]', space=smem, size = 0x4, offset = 0x4, fixed_abs, tag = 'smem constant byte address 0x4 - core index']
  #allocation1 [shape = 'u32[72,128]{1,0:T(1,128)}', space=vmem, size = 0x9000, scoped, tag = 'internal scratch']
  #allocation2 [shape = 'f32[1]{0:T(128)S(6)}', space=smem, size = 0x200, scoped, tag = 'scoped memory for _forward.1']
  %s0 = inlined_call_operand.<no memory space> [shape: f32[1], index: 0, kind: input, shape index: {}]
  %s1 = inlined_call_operand.vmem [shape: f32[8,32], index: 1, kind: input, shape index: {}]
  %s2 = inlined_call_operand.vmem [shape: s32[8,1], index: 2, kind: input, shape index: {}]
  %s3 = inlined_call_operand.vmem [shape: f32[16,128], index: 3, kind: input, shape index: {}]
  %s4 = inlined_call_operand.vmem [shape: f32[16,128], index: 4, kind: input, shape index: {}]
  %s5 = inlined_call_operand.vmem [shape: f32[16,128], index: 5, kind: input, shape index: {}]
  %s6 = inlined_call_operand.vmem [shape: f32[16,128], index: 6, kind: input, shape index: {}]
  %s7 = inlined_call_operand.vmem [shape: f32[1,128], index: 7, kind: output, shape index: {}]
  %s8 = sld [smem:[#allocation0]]
  $region38: #{_forward.1} parent=0
    _
  %s10 = ssub.s32 1, %s8
  %s11 = scalar_select 0, %s10, %s8
  %12 = sst [smem:[#allocation2]] %s0
  // Predicated region
  $region2: #{_forward.1} parent=0 // pred_check
    _
  $region3: #{_forward.1} parent=0 // pred_check_branch
    %14 = sbr.rel (0) target = $region5
  $region4: #{_forward.1} parent=0 // pred_region
    _
  $region5: #{_forward.1} parent=0 // pred_fallthru
    _
  // Predicated region
  $region6: #{_forward.1} parent=0 // pred_check
    _
  $region7: #{_forward.1} parent=0 // pred_check_branch
    %16 = sbr.rel (0) target = $region9
  $region8: #{_forward.1} parent=0 // pred_region
    _
  $region9: #{_forward.1} parent=0 // pred_fallthru
    _
  // Predicated region
  $region10: #{_forward.1} parent=0 // pred_check
    _
  $region11: #{_forward.1} parent=0 // pred_check_branch
    %18 = sbr.rel (0) target = $region13
  $region12: #{_forward.1} parent=0 // pred_region
    _
  $region13: #{_forward.1} parent=0 // pred_fallthru
    _
  // Predicated region
  $region14: #{_forward.1} parent=0 // pred_check
    _
  $region15: #{_forward.1} parent=0 // pred_check_branch
    %20 = sbr.rel (0) target = $region17
  $region16: #{_forward.1} parent=0 // pred_region
    _
  $region17: #{_forward.1} parent=0 // pred_fallthru
    _
  // Predicated region
  $region18: #{_forward.1} parent=0 // pred_check
    _
  $region19: #{_forward.1} parent=0 // pred_check_branch
    %22 = sbr.rel (0) target = $region21
  $region20: #{_forward.1} parent=0 // pred_region
    _
  $region21: #{_forward.1} parent=0 // pred_fallthru
    _
  // Predicated region
  $region22: #{_forward.1} parent=0 // pred_check
    _
  $region23: #{_forward.1} parent=0 // pred_check_branch
    %24 = sbr.rel (0) target = $region25
  $region24: #{_forward.1} parent=0 // pred_region
    _
  $region25: #{_forward.1} parent=0 // pred_fallthru
    _
  // Predicated region
  $region26: #{_forward.1} parent=0 // pred_check
    _
  $region27: #{_forward.1} parent=0 // pred_check_branch
    %26 = sbr.rel (0) target = $region29
  $region28: #{_forward.1} parent=0 // pred_region
    _
  $region29: #{_forward.1} parent=0 // pred_fallthru
    _
  %v27 = vld [vmem:[%s1] sm:$0xff]
  %v28 = vld [vmem:[%s2] sm:$0xff]
  %vm29 = vcmask 261120
  %v30 = vsel %vm29, %v27, -inf
  %31 = vmax.xlane.f32.xlu0 %v30
  %v32 = vpop.xlane.xlu0 %31
  %v33 = vsub.f32 %v27, %v32
  %v34 = vmul.f32 %v33, 1.442695
  %v35 = vpow.pop %v34
  %v36 = vsel %vm29, %v35, 0.0
  %37 = vadd.xlane.f32.xlu0 %v36
  %v38 = vpop.xlane.xlu0 %37
  %v39 = vlog2.pop %v38
  %v40 = vmul.f32 %v39, 0.6931472
  %v41 = vadd.f32 %v40, %v32
  %v42 = vlaneseq
  %v43 = vand.u32 %v42, 127
  %44 = vset.pattern.permute.xlu0 0
  %45 = vperm.xlu0 %44, %v28
  %v46 = vpop.permute.xlu0 %45
  %vm47 = vcmp.eq.s32.totalorder %v43, %v46
  %v48 = vsel %vm47, %v27, 0.0
  %v49 = vsel %vm29, %v48, 0.0
  %50 = vadd.xlane.f32.xlu0 %v49
  %v51 = vpop.xlane.xlu0 %50
  %v52 = vsub.f32 %v41, %v51
  %vm53 = vcmask 7168
  %v54 = vsel %vm53, %v52, 0.0
  %55 = vadd.xlane.f32.xlu0 %v54
  %v56 = vpop.xlane.xlu0 %55
  %v57 = vrot.slane %v56, 4
  %v58 = vadd.f32 %v56, %v57
  %v59 = vrot.slane %v58, 2
  %v60 = vadd.f32 %v58, %v59
  %v61 = vrot.slane %v60, 1
  %v62 = vadd.f32 %v60, %v61
  %s63 = vtos %v62
  %v64 = vstv %s63
  %v65 = vmul.f32 %v64, 0.125
  %v66 = vld [vmem:[%s3] sm:$0xff]
  %v67 = vld [vmem:[%s3 + $0x8] sm:$0xff]
  %v68 = vld [vmem:[%s4] sm:$0xff]
  %v69 = vld [vmem:[%s4 + $0x8] sm:$0xff]
  %vm70 = vcmp.gt.f32.partialorder %v68, 0.0
  %vm71 = vcmp.gt.f32.partialorder %v69, 0.0
  %v72 = vsel %vm70, %v68, 0.0
  %v73 = vsel %vm71, %v69, 0.0
  %v74 = vsel %vm70, %v68, 1.0
  %v75 = vsel %vm71, %v69, 1.0
  %v76 = vsel %vm70, %v66, 1.0
  %v77 = vsel %vm71, %v67, 1.0
  %v78 = vlog2.pop %v74
  %v79 = vmul.f32 %v78, 0.6931472
  %v80 = vlog2.pop %v75
  %v81 = vmul.f32 %v80, 0.6931472
  %v82 = vlog2.pop %v76
  %v83 = vmul.f32 %v82, 0.6931472
  %v84 = vlog2.pop %v77
  %v85 = vmul.f32 %v84, 0.6931472
  %v86 = vsub.f32 %v79, %v83
  %v87 = vsub.f32 %v81, %v85
  %v88 = vmul.f32 %v72, %v86
  %v89 = vmul.f32 %v73, %v87
  %v90 = vadd.f32 %v88, %v89
  %91 = vadd.xlane.f32.xlu0 %v90
  %v92 = vpop.xlane.xlu0 %91
  %v93 = vrot.slane %v92, 4
  %v94 = vadd.f32 %v92, %v93
  %v95 = vrot.slane %v94, 2
  %v96 = vadd.f32 %v94, %v95
  %v97 = vrot.slane %v96, 1
  %v98 = vadd.f32 %v96, %v97
  %s99 = vtos %v98
  %v100 = vstv %s99
  %v101 = vmul.f32 %v100, 0.5
  %v102 = vld [vmem:[%s5] sm:$0xff]
  %v103 = vld [vmem:[%s5 + $0x8] sm:$0xff]
  %v104 = vld [vmem:[%s6] sm:$0xff]
  %v105 = vld [vmem:[%s6 + $0x8] sm:$0xff]
  %vm106 = vcmp.gt.f32.partialorder %v104, 0.0
  %vm107 = vcmp.gt.f32.partialorder %v105, 0.0
  %v108 = vsel %vm106, %v104, 0.0
  %v109 = vsel %vm107, %v105, 0.0
  %v110 = vsel %vm106, %v104, 1.0
  %v111 = vsel %vm107, %v105, 1.0
  %v112 = vsel %vm106, %v102, 1.0
  %v113 = vsel %vm107, %v103, 1.0
  %v114 = vlog2.pop %v110
  %v115 = vmul.f32 %v114, 0.6931472
  %v116 = vlog2.pop %v111
  %v117 = vmul.f32 %v116, 0.6931472
  %v118 = vlog2.pop %v112
  %v119 = vmul.f32 %v118, 0.6931472
  %v120 = vlog2.pop %v113
  %v121 = vmul.f32 %v120, 0.6931472
  %v122 = vsub.f32 %v115, %v119
  %v123 = vsub.f32 %v117, %v121
  %v124 = vmul.f32 %v108, %v122
  %v125 = vmul.f32 %v109, %v123
  %v126 = vadd.f32 %v124, %v125
  %127 = vadd.xlane.f32.xlu0 %v126
  %v128 = vpop.xlane.xlu0 %127
  %v129 = vrot.slane %v128, 4
  %v130 = vadd.f32 %v128, %v129
  %v131 = vrot.slane %v130, 2
  %v132 = vadd.f32 %v130, %v131
  %v133 = vrot.slane %v132, 1
  %v134 = vadd.f32 %v132, %v133
  %s135 = vtos %v134
  %v136 = vstv %s135
  %v137 = vmul.f32 %v136, 0.5
  %s138 = sld [smem:[#allocation2]]
  %v139 = vstv %s138
  %v140 = vmul.f32 %v139, %v101
  %v141 = vadd.f32 %v65, %v140
  %v142 = vmul.f32 %v139, %v137
  %v143 = vadd.f32 %v141, %v142
  %vm144 = vcmp.eq.s32.totalorder %v43, 0
  %v145 = vsel %vm144, %v65, 0.0
  %vm146 = vcmp.eq.s32.totalorder %v43, 1
  %v147 = vsel %vm146, %v101, 0.0
  %v148 = vadd.f32 %v145, %v147
  %vm149 = vcmp.eq.s32.totalorder %v43, 2
  %v150 = vsel %vm149, %v137, 0.0
  %v151 = vadd.f32 %v148, %v150
  %vm152 = vcmp.eq.s32.totalorder %v43, 3
  %v153 = vsel %vm152, %v143, 0.0
  %v154 = vadd.f32 %v151, %v153
  %155 = vst [vmem:[%s7] sm:$0x1] %v154
  // Predicated region
  $region30: #{_forward.1} parent=0 // pred_check
    _
  $region31: #{_forward.1} parent=0 // pred_check_branch
    %157 = sbr.rel (0) target = $region33
  $region32: #{_forward.1} parent=0 // pred_region
    _
  $region33: #{_forward.1} parent=0 // pred_fallthru
    _
  // Predicated region
  $region34: #{_forward.1} parent=0 // pred_check
    _
  $region35: #{_forward.1} parent=0 // pred_check_branch
    %159 = sbr.rel (0) target = $region37
  $region36: #{_forward.1} parent=0 // pred_region
    _
  $region37: #{_forward.1} parent=0 // pred_fallthru
    _

</llo_original>
